<compile_context>
chip_gen: v5e
topology: v5e:2x2
jax: 0.10.0
libtpu: 0.0.40
codegen_flags: <defaults>
</compile_context>

<pallas_src>
import math
from functools import partial

import jax
import jax.numpy as jnp
from jax.experimental import pallas as pl
from jax.experimental.pallas import tpu as pltpu


def _round_up(x, m):
    return ((x + m - 1) // m) * m


# ----------------------------- Fused kernel ---------------------------------
def _vmf_fused_kernel(x_ref, w_ref, b_ref, beta_ref, logu_ref, v_ref,
                      mk_ref, z_ref, *, out_dim):
    """One grid step = one batch tile of `tn` rows; everything stays in VMEM.

    Column layout (width out_pad, lane-dense):
      fused weight / h / miu slab : [0:out_dim]=miu head, [out_dim]=kappa head,
      remaining columns are exact zeros (zero weights + zero bias).
    """
    mm1 = float(out_dim - 1)

    # --- both Linear heads in one bf16 MXU pass -------------------------------
    h = jnp.dot(x_ref[...], w_ref[...],
                preferred_element_type=jnp.float32) + b_ref[...]

    k_raw = h[:, out_dim:out_dim + 1]                     # static slice, (tn, 1)

    col = jax.lax.broadcasted_iota(jnp.int32, h.shape, 1)
    is_kappa_col = col == out_dim
    miu_raw = jnp.where(is_kappa_col, 0.0, h)             # padding cols already 0

    # toMiu: L2-normalize over the full (zero-padded) lane-dense row.
    miu = miu_raw * jax.lax.rsqrt(
        jnp.sum(miu_raw * miu_raw, axis=-1, keepdims=True))

    # toKappa: softplus + 1.
    kappa = jnp.maximum(k_raw, 0.0) + jnp.log1p(jnp.exp(-jnp.abs(k_raw))) + 1.0

    # Lane-dense output slab: miu with kappa packed into its (zero) column.
    mk_ref[...] = jnp.where(is_kappa_col, kappa, miu)

    # --- __sample_w_rej envelope (narrow (tn, 1) chain) ------------------------
    c = jnp.sqrt(4.0 * kappa * kappa + mm1 * mm1)
    b_true = (c - 2.0 * kappa) * (1.0 / mm1)
    b_app = (0.25 * mm1) / kappa
    s = jnp.clip(kappa - 10.0, 0.0, 1.0)
    bb = b_app * s + b_true * (1.0 - s)
    a = (mm1 + 2.0 * kappa + c) * 0.25
    two_ab = 2.0 * a * bb
    d = 2.0 * two_ab / (1.0 + bb) - mm1 * math.log(mm1)

    # --- __while_loop: vectorized over K pre-drawn (Beta, logU) attempts; keep
    #     the first accepted candidate per row.
    # TODO(synk): reference uses an unbounded data-dependent while loop; a row
    #             that never accepts within K attempts falls back to its last
    #             candidate (per-attempt acceptance is high, so P(fallback) ~ 0).
    e = beta_ref[...].astype(jnp.float32)                 # (tn, K)
    logu = logu_ref[...].astype(jnp.float32)              # (tn, K)
    inv_denom = 1.0 / (1.0 - (1.0 - bb) * e)              # exact: forms the sample
    w_cand = (1.0 - (1.0 + bb) * e) * inv_denom
    t = two_ab * inv_denom
    accept = (mm1 * jnp.log(t) - t + d) > logu

    K = e.shape[-1]
    k_iota = jax.lax.broadcasted_iota(jnp.int32, e.shape, 1)
    first_k = jnp.min(jnp.where(accept, k_iota, K), axis=-1, keepdims=True)
    first_k = jnp.minimum(first_k, K - 1)                 # no-accept fallback
    w = jnp.sum(jnp.where(k_iota == first_k, w_cand, 0.0),
                axis=-1, keepdims=True)

    # --- tangent component: cat((w, w_ * v/||v||), -1); v has col 0 == 0 -------
    w_perp = jnp.sqrt(jnp.maximum(1.0 - w * w, 1e-10))
    v = v_ref[...].astype(jnp.float32)
    v_unit = v * jax.lax.rsqrt(jnp.sum(v * v, axis=-1, keepdims=True))

    e1 = (col == 0).astype(jnp.float32)
    xs = w * e1 + w_perp * v_unit

    # --- __householder_rotation: reflect xs from e1 onto miu -------------------
    uh = e1 - miu
    uh = uh / (jnp.sqrt(jnp.sum(uh * uh, axis=-1, keepdims=True)) + 1e-5)
    z_ref[...] = xs - 2.0 * jnp.sum(xs * uh, axis=-1, keepdims=True) * uh


# ----------------------------- Wrapper ---------------------------------------
def fuse_vmf_heads(w_miu, b_miu, w_kappa, b_kappa):
    """Pack toMiu/toKappa into one lane-padded bf16 weight + f32 bias.

    Do this ONCE at parameter-init time (hoisted out of the per-forward path).
    """
    in_dim, out_dim = w_miu.shape
    # TODO(synk): when out_dim is already a multiple of 128 this adds a whole
    #             128-lane tile for a single kappa column; compute kappa with a
    #             separate VPU multiply+reduce in that case instead.
    out_pad = _round_up(out_dim + 1, 128)
    w = jnp.zeros((in_dim, out_pad), jnp.float32)
    w = w.at[:, :out_dim].set(w_miu).at[:, out_dim].set(w_kappa[:, 0])
    b = jnp.zeros((1, out_pad), jnp.float32)
    b = b.at[0, :out_dim].set(b_miu).at[0, out_dim].set(b_kappa[0])
    return w.astype(jnp.bfloat16), b, out_dim


def vmf_module_forward(x, w_fused, b_fused, out_dim, sample_key,
                       num_attempts=32, tile_n=2048):
    """Returns (miu, kappa, latent_vector) for the rejection (out_dim != 3) path."""
    n, in_dim = x.shape
    out_pad = w_fused.shape[1]
    K = num_attempts
    # TODO(synk): the out_dim == 3 closed-form __sample_w3 branch and the
    #             no_instance early-return path are not implemented.

    # Random draws (glue; independent of miu/kappa so issued before the kernel).
    # bf16 halves their HBM traffic; log-uniforms are precomputed so the kernel
    # runs only one transcendental (log t) over the attempt block.
    kb, ku, kv = jax.random.split(sample_key, 3)
    alpha = (out_dim - 1) / 2.0
    beta_e = jax.random.beta(kb, alpha, alpha, (n, K)).astype(jnp.bfloat16)
    logu = jnp.log(jax.random.uniform(ku, (n, K), jnp.float32,
                                      minval=1e-6, maxval=1.0)).astype(jnp.bfloat16)
    v = jnp.zeros((n, out_pad), jnp.float32)
    v = v.at[:, 1:out_dim].set(
        jax.random.normal(kv, (n, out_dim - 1), jnp.float32)).astype(jnp.bfloat16)
    x_bf = x.astype(jnp.bfloat16)          # bf16 is the native MXU dtype

    # Batch tiling: pad n to a tile multiple and keep >= 2 grid steps when the
    # batch allows it, so the "parallel" axis can shard across v7x's two cores.
    n8 = _round_up(n, 8)
    tn = max(8, min(_round_up(tile_n, 8), n8))
    if tn >= n8 and n8 >= 16:
        tn = _round_up(n8 // 2, 8)
    n_pad = _round_up(n8, tn)
    if n_pad > n:
        pad = ((0, n_pad - n), (0, 0))
        x_bf, beta_e, logu, v = [jnp.pad(a, pad) for a in (x_bf, beta_e, logu, v)]
    grid = (n_pad // tn,)

    def row_spec(d):
        return pl.BlockSpec((tn, d), lambda i: (i, 0))

    def resident_spec(shape):
        # Constant block across the grid (pipeline_mode=pl.Buffered(1) would
        # single-buffer it; negligible at this in_dim so left at the default).
        return pl.BlockSpec(shape, lambda i: (0, 0))

    mk, z = pl.pallas_call(
        partial(_vmf_fused_kernel, out_dim=out_dim),
        out_shape=(jax.ShapeDtypeStruct((n_pad, out_pad), jnp.float32),
                   jax.ShapeDtypeStruct((n_pad, out_pad), jnp.float32)),
        grid_spec=pltpu.PrefetchScalarGridSpec(
            num_scalar_prefetch=0,
            grid=grid,
            in_specs=[row_spec(in_dim),                  # x (bf16)
                      resident_spec((in_dim, out_pad)),  # fused weight (bf16)
                      resident_spec((1, out_pad)),       # fused bias (f32)
                      row_spec(K),                       # Beta draws (bf16)
                      row_spec(K),                       # log-uniform draws (bf16)
                      row_spec(out_pad)],                # tangent noise (bf16)
            out_specs=[row_spec(out_pad),                # miu slab (+ kappa col)
                       row_spec(out_pad)]),              # z slab
        compiler_params=pltpu.CompilerParams(
            dimension_semantics=("parallel",),
            vmem_limit_bytes=32 * 1024 * 1024),
    )(x_bf, w_fused, b_fused, beta_e, logu, v)

    miu = mk[:n, :out_dim]
    kappa = mk[:n, out_dim:out_dim + 1]
    z_out = z[:n, :out_dim]
    return miu, kappa, z_out


# ----------------------------- Main -------------------------------------------
if __name__ == "__main__":
    n_batch, in_dim, out_dim = 16, 32, 32   # out_dim != 3 -> rejection branch

    key = jax.random.PRNGKey(0)
    kx, kwm, kbm, kwk, kbk, ksamp = jax.random.split(key, 6)

    x = jax.random.normal(kx, (n_batch, in_dim), jnp.float32)

    # Deterministic Linear params (PyTorch-style uniform(-1/sqrt(in), 1/sqrt(in))).
    bound = 1.0 / math.sqrt(in_dim)
    w_miu = jax.random.uniform(kwm, (in_dim, out_dim), jnp.float32, -bound, bound)
    b_miu = jax.random.uniform(kbm, (out_dim,), jnp.float32, -bound, bound)
    w_kappa = jax.random.uniform(kwk, (in_dim, 1), jnp.float32, -bound, bound)
    b_kappa = jax.random.uniform(kbk, (1,), jnp.float32, -bound, bound)

    # Fuse the two heads once at init time, then run the fused forward.
    # With n=16 the wrapper picks tn=8 -> 2 grid steps (tiling + resident weights
    # exercised; batch axis marked "parallel").
    w_fused, b_fused, out_dim_ = fuse_vmf_heads(w_miu, b_miu, w_kappa, b_kappa)
    miu, kappa, z = vmf_module_forward(x, w_fused, b_fused, out_dim_, ksamp)
    jax.block_until_ready((miu, kappa, z))

    # Sanity: miu and latent samples lie on the unit hypersphere, kappa > 1.
    assert miu.shape == (n_batch, out_dim) and z.shape == (n_batch, out_dim)
    assert kappa.shape == (n_batch, 1)
    miu_norm = jnp.linalg.norm(miu, axis=-1)
    z_norm = jnp.linalg.norm(z, axis=-1)
    assert jnp.allclose(miu_norm, 1.0, atol=1e-3), miu_norm
    assert jnp.allclose(z_norm, 1.0, atol=1e-2), z_norm
    assert bool(jnp.all(kappa > 1.0)), kappa

    print("KERNEL_OK")
</pallas_src>

<mosaic_0001>
module attributes {stable_mosaic.version = 11 : i64} {
  func.func @_vmf_fused_kernel(%arg0: i32, %arg1: memref<8x32xbf16, #tpu.memory_space<vmem>>, %arg2: memref<32x128xbf16, #tpu.memory_space<vmem>>, %arg3: memref<1x128xf32, #tpu.memory_space<vmem>>, %arg4: memref<8x32xbf16, #tpu.memory_space<vmem>>, %arg5: memref<8x32xbf16, #tpu.memory_space<vmem>>, %arg6: memref<8x128xbf16, #tpu.memory_space<vmem>>, %arg7: memref<8x128xf32, #tpu.memory_space<vmem>>, %arg8: memref<8x128xf32, #tpu.memory_space<vmem>>) attributes {dimension_semantics = [#tpu.dimension_semantics<parallel>], iteration_bounds = array<i64: 2>, scalar_prefetch = 0 : i64, scratch_operands = 0 : i64, tpu.core_type = #tpu.core_type<tc>, window_params = [{transform_indices = @transform_0, window_bounds = array<i64: 8, 32>}, {pipeline_mode = #tpu.pipeline_mode<synchronous>, transform_indices = @transform_1, window_bounds = array<i64: 32, 128>}, {pipeline_mode = #tpu.pipeline_mode<synchronous>, transform_indices = @transform_2, window_bounds = array<i64: 1, 128>}, {transform_indices = @transform_3, window_bounds = array<i64: 8, 32>}, {transform_indices = @transform_4, window_bounds = array<i64: 8, 32>}, {transform_indices = @transform_5, window_bounds = array<i64: 8, 128>}, {transform_indices = @transform_6, window_bounds = array<i64: 8, 128>}, {transform_indices = @transform_7, window_bounds = array<i64: 8, 128>}]} {
    %c0 = arith.constant 0 : index
    %c0_0 = arith.constant 0 : index
    %0 = vector.load %arg1[%c0, %c0_0] : memref<8x32xbf16, #tpu.memory_space<vmem>>, vector<8x32xbf16>
    %c0_1 = arith.constant 0 : index
    %c0_2 = arith.constant 0 : index
    %1 = vector.load %arg2[%c0_1, %c0_2] : memref<32x128xbf16, #tpu.memory_space<vmem>>, vector<32x128xbf16>
    %cst = arith.constant dense<0.000000e+00> : vector<8x128xf32>
    %2 = tpu.matmul %0, %1, %cst {dimension_numbers = #tpu.dot_dimension_numbers<[1], [0], [0], [1], [0, 0, 1, 1], [], []>} : vector<8x32xbf16>, vector<32x128xbf16>, vector<8x128xf32> -> vector<8x128xf32>
    %c0_3 = arith.constant 0 : index
    %c0_4 = arith.constant 0 : index
    %3 = vector.load %arg3[%c0_3, %c0_4] : memref<1x128xf32, #tpu.memory_space<vmem>>, vector<1x128xf32>
    %4 = vector.broadcast %3 : vector<1x128xf32> to vector<8x128xf32>
    %5 = arith.addf %2, %4 : vector<8x128xf32>
    %6 = vector.extract_strided_slice %5 {offsets = [0, 32], sizes = [8, 1], strides = [1, 1]} : vector<8x128xf32> to vector<8x1xf32>
    %7 = tpu.iota {dimensions = array<i32: 1>} : vector<8x128xi32>
    %c32_i32 = arith.constant 32 : i32
    %8 = vector.broadcast %c32_i32 : i32 to vector<8x128xi32>
    %9 = arith.cmpi eq, %7, %8 : vector<8x128xi32>
    %cst_5 = arith.constant 0.000000e+00 : f32
    %10 = vector.broadcast %cst_5 : f32 to vector<8x128xf32>
    %11 = arith.select %9, %10, %5 : vector<8x128xi1>, vector<8x128xf32>
    %12 = arith.mulf %11, %11 : vector<8x128xf32>
    %cst_6 = arith.constant dense<0.000000e+00> : vector<8xf32>
    %13 = vector.multi_reduction <add>, %12, %cst_6 [1] : vector<8x128xf32> to vector<8xf32>
    %14 = vector.shape_cast %13 : vector<8xf32> to vector<8x1xf32>
    %15 = math.rsqrt %14 : vector<8x1xf32>
    %16 = vector.broadcast %15 : vector<8x1xf32> to vector<8x128xf32>
    %17 = arith.mulf %11, %16 : vector<8x128xf32>
    %cst_7 = arith.constant 0.000000e+00 : f32
    %18 = vector.broadcast %cst_7 : f32 to vector<8x1xf32>
    %19 = arith.maximumf %6, %18 : vector<8x1xf32>
    %20 = math.absf %6 : vector<8x1xf32>
    %cst_8 = arith.constant 0.000000e+00 : f32
    %21 = vector.broadcast %cst_8 : f32 to vector<8x1xf32>
    %22 = arith.subf %21, %20 : vector<8x1xf32>
    %23 = math.exp %22 : vector<8x1xf32>
    %24 = math.log1p %23 : vector<8x1xf32>
    %25 = arith.addf %19, %24 : vector<8x1xf32>
    %cst_9 = arith.constant 1.000000e+00 : f32
    %26 = vector.broadcast %cst_9 : f32 to vector<8x1xf32>
    %27 = arith.addf %25, %26 : vector<8x1xf32>
    %28 = vector.shape_cast %27 : vector<8x1xf32> to vector<8x1xf32>
    %29 = vector.broadcast %28 : vector<8x1xf32> to vector<8x128xf32>
    %30 = arith.select %9, %29, %17 : vector<8x128xi1>, vector<8x128xf32>
    %c0_10 = arith.constant 0 : index
    %c0_11 = arith.constant 0 : index
    %31 = vector.load %arg7[%c0_10, %c0_11] : memref<8x128xf32, #tpu.memory_space<vmem>>, vector<8x128xf32>
    tpu.vector_store %arg7[%c0_10, %c0_11], %30 {strides = array<i32>} : memref<8x128xf32, #tpu.memory_space<vmem>>, vector<8x128xf32>,
    %cst_12 = arith.constant 4.000000e+00 : f32
    %32 = vector.broadcast %cst_12 : f32 to vector<8x1xf32>
    %33 = arith.mulf %32, %27 : vector<8x1xf32>
    %34 = arith.mulf %33, %27 : vector<8x1xf32>
    %cst_13 = arith.constant 9.610000e+02 : f32
    %35 = vector.broadcast %cst_13 : f32 to vector<8x1xf32>
    %36 = arith.addf %34, %35 : vector<8x1xf32>
    %37 = math.sqrt %36 : vector<8x1xf32>
    %cst_14 = arith.constant 2.000000e+00 : f32
    %38 = vector.broadcast %cst_14 : f32 to vector<8x1xf32>
    %39 = arith.mulf %38, %27 : vector<8x1xf32>
    %40 = arith.subf %37, %39 : vector<8x1xf32>
    %cst_15 = arith.constant 0.0322580636 : f32
    %41 = vector.broadcast %cst_15 : f32 to vector<8x1xf32>
    %42 = arith.mulf %40, %41 : vector<8x1xf32>
    %cst_16 = arith.constant 7.750000e+00 : f32
    %43 = vector.broadcast %cst_16 : f32 to vector<8x1xf32>
    %44 = arith.divf %43, %27 : vector<8x1xf32>
    %cst_17 = arith.constant 1.000000e+01 : f32
    %45 = vector.broadcast %cst_17 : f32 to vector<8x1xf32>
    %46 = arith.subf %27, %45 : vector<8x1xf32>
    %cst_18 = arith.constant 0.000000e+00 : f32
    %cst_19 = arith.constant 1.000000e+00 : f32
    %47 = vector.broadcast %cst_18 : f32 to vector<8x1xf32>
    %48 = arith.maximumf %47, %46 : vector<8x1xf32>
    %49 = vector.broadcast %cst_19 : f32 to vector<8x1xf32>
    %50 = arith.minimumf %49, %48 : vector<8x1xf32>
    %51 = arith.mulf %44, %50 : vector<8x1xf32>
    %cst_20 = arith.constant 1.000000e+00 : f32
    %52 = vector.broadcast %cst_20 : f32 to vector<8x1xf32>
    %53 = arith.subf %52, %50 : vector<8x1xf32>
    %54 = arith.mulf %42, %53 : vector<8x1xf32>
    %55 = arith.addf %51, %54 : vector<8x1xf32>
    %cst_21 = arith.constant 2.000000e+00 : f32
    %56 = vector.broadcast %cst_21 : f32 to vector<8x1xf32>
    %57 = arith.mulf %56, %27 : vector<8x1xf32>
    %cst_22 = arith.constant 3.100000e+01 : f32
    %58 = vector.broadcast %cst_22 : f32 to vector<8x1xf32>
    %59 = arith.addf %58, %57 : vector<8x1xf32>
    %60 = arith.addf %59, %37 : vector<8x1xf32>
    %cst_23 = arith.constant 2.500000e-01 : f32
    %61 = vector.broadcast %cst_23 : f32 to vector<8x1xf32>
    %62 = arith.mulf %60, %61 : vector<8x1xf32>
    %cst_24 = arith.constant 2.000000e+00 : f32
    %63 = vector.broadcast %cst_24 : f32 to vector<8x1xf32>
    %64 = arith.mulf %63, %62 : vector<8x1xf32>
    %65 = arith.mulf %64, %55 : vector<8x1xf32>
    %cst_25 = arith.constant 2.000000e+00 : f32
    %66 = vector.broadcast %cst_25 : f32 to vector<8x1xf32>
    %67 = arith.mulf %66, %65 : vector<8x1xf32>
    %cst_26 = arith.constant 1.000000e+00 : f32
    %68 = vector.broadcast %cst_26 : f32 to vector<8x1xf32>
    %69 = arith.addf %68, %55 : vector<8x1xf32>
    %70 = arith.divf %67, %69 : vector<8x1xf32>
    %cst_27 = arith.constant 106.453606 : f32
    %71 = vector.broadcast %cst_27 : f32 to vector<8x1xf32>
    %72 = arith.subf %70, %71 : vector<8x1xf32>
    %c0_28 = arith.constant 0 : index
    %c0_29 = arith.constant 0 : index
    %73 = vector.load %arg4[%c0_28, %c0_29] : memref<8x32xbf16, #tpu.memory_space<vmem>>, vector<8x32xbf16>
    %74 = arith.extf %73 : vector<8x32xbf16> to vector<8x32xf32>
    %c0_30 = arith.constant 0 : index
    %c0_31 = arith.constant 0 : index
    %75 = vector.load %arg5[%c0_30, %c0_31] : memref<8x32xbf16, #tpu.memory_space<vmem>>, vector<8x32xbf16>
    %76 = arith.extf %75 : vector<8x32xbf16> to vector<8x32xf32>
    %cst_32 = arith.constant 1.000000e+00 : f32
    %77 = vector.broadcast %cst_32 : f32 to vector<8x1xf32>
    %78 = arith.subf %77, %55 : vector<8x1xf32>
    %79 = vector.broadcast %78 : vector<8x1xf32> to vector<8x32xf32>
    %80 = arith.mulf %79, %74 : vector<8x32xf32>
    %cst_33 = arith.constant 1.000000e+00 : f32
    %81 = vector.broadcast %cst_33 : f32 to vector<8x32xf32>
    %82 = arith.subf %81, %80 : vector<8x32xf32>
    %cst_34 = arith.constant 1.000000e+00 : f32
    %83 = vector.broadcast %cst_34 : f32 to vector<8x32xf32>
    %84 = arith.divf %83, %82 : vector<8x32xf32>
    %cst_35 = arith.constant 1.000000e+00 : f32
    %85 = vector.broadcast %cst_35 : f32 to vector<8x1xf32>
    %86 = arith.addf %85, %55 : vector<8x1xf32>
    %87 = vector.broadcast %86 : vector<8x1xf32> to vector<8x32xf32>
    %88 = arith.mulf %87, %74 : vector<8x32xf32>
    %cst_36 = arith.constant 1.000000e+00 : f32
    %89 = vector.broadcast %cst_36 : f32 to vector<8x32xf32>
    %90 = arith.subf %89, %88 : vector<8x32xf32>
    %91 = arith.mulf %90, %84 : vector<8x32xf32>
    %92 = vector.broadcast %65 : vector<8x1xf32> to vector<8x32xf32>
    %93 = arith.mulf %92, %84 : vector<8x32xf32>
    %94 = math.log %93 : vector<8x32xf32>
    %cst_37 = arith.constant 3.100000e+01 : f32
    %95 = vector.broadcast %cst_37 : f32 to vector<8x32xf32>
    %96 = arith.mulf %95, %94 : vector<8x32xf32>
    %97 = arith.subf %96, %93 : vector<8x32xf32>
    %98 = vector.broadcast %72 : vector<8x1xf32> to vector<8x32xf32>
    %99 = arith.addf %97, %98 : vector<8x32xf32>
    %100 = arith.cmpf ogt, %99, %76 : vector<8x32xf32>
    %101 = tpu.iota {dimensions = array<i32: 1>} : vector<8x32xi32>
    %c32_i32_38 = arith.constant 32 : i32
    %102 = vector.broadcast %c32_i32_38 : i32 to vector<8x32xi32>
    %103 = arith.select %100, %101, %102 : vector<8x32xi1>, vector<8x32xi32>
    %cst_39 = arith.constant dense<2147483647> : vector<8xi32>
    %104 = vector.multi_reduction <minsi>, %103, %cst_39 [1] : vector<8x32xi32> to vector<8xi32>
    %105 = vector.shape_cast %104 : vector<8xi32> to vector<8x1xi32>
    %c31_i32 = arith.constant 31 : i32
    %106 = vector.broadcast %c31_i32 : i32 to vector<8x1xi32>
    %107 = arith.minsi %105, %106 : vector<8x1xi32>
    %108 = vector.broadcast %107 : vector<8x1xi32> to vector<8x32xi32>
    %109 = arith.cmpi eq, %101, %108 : vector<8x32xi32>
    %cst_40 = arith.constant 0.000000e+00 : f32
    %110 = vector.broadcast %cst_40 : f32 to vector<8x32xf32>
    %111 = arith.select %109, %91, %110 : vector<8x32xi1>, vector<8x32xf32>
    %cst_41 = arith.constant dense<0.000000e+00> : vector<8xf32>
    %112 = vector.multi_reduction <add>, %111, %cst_41 [1] : vector<8x32xf32> to vector<8xf32>
    %113 = vector.shape_cast %112 : vector<8xf32> to vector<8x1xf32>
    %114 = arith.mulf %113, %113 : vector<8x1xf32>
    %cst_42 = arith.constant 1.000000e+00 : f32
    %115 = vector.broadcast %cst_42 : f32 to vector<8x1xf32>
    %116 = arith.subf %115, %114 : vector<8x1xf32>
    %cst_43 = arith.constant 1.000000e-10 : f32
    %117 = vector.broadcast %cst_43 : f32 to vector<8x1xf32>
    %118 = arith.maximumf %116, %117 : vector<8x1xf32>
    %119 = math.sqrt %118 : vector<8x1xf32>
    %c0_44 = arith.constant 0 : index
    %c0_45 = arith.constant 0 : index
    %120 = vector.load %arg6[%c0_44, %c0_45] : memref<8x128xbf16, #tpu.memory_space<vmem>>, vector<8x128xbf16>
    %121 = arith.extf %120 : vector<8x128xbf16> to vector<8x128xf32>
    %122 = arith.mulf %121, %121 : vector<8x128xf32>
    %cst_46 = arith.constant dense<0.000000e+00> : vector<8xf32>
    %123 = vector.multi_reduction <add>, %122, %cst_46 [1] : vector<8x128xf32> to vector<8xf32>
    %124 = vector.shape_cast %123 : vector<8xf32> to vector<8x1xf32>
    %125 = math.rsqrt %124 : vector<8x1xf32>
    %126 = vector.broadcast %125 : vector<8x1xf32> to vector<8x128xf32>
    %127 = arith.mulf %121, %126 : vector<8x128xf32>
    %c0_i32 = arith.constant 0 : i32
    %128 = vector.broadcast %c0_i32 : i32 to vector<8x128xi32>
    %129 = arith.cmpi eq, %7, %128 : vector<8x128xi32>
    %130 = arith.extui %129 : vector<8x128xi1> to vector<8x128xi32>
    %131 = arith.sitofp %130 : vector<8x128xi32> to vector<8x128xf32>
    %132 = vector.broadcast %113 : vector<8x1xf32> to vector<8x128xf32>
    %133 = arith.mulf %132, %131 : vector<8x128xf32>
    %134 = vector.broadcast %119 : vector<8x1xf32> to vector<8x128xf32>
    %135 = arith.mulf %134, %127 : vector<8x128xf32>
    %136 = arith.addf %133, %135 : vector<8x128xf32>
    %137 = arith.subf %131, %17 : vector<8x128xf32>
    %138 = arith.mulf %137, %137 : vector<8x128xf32>
    %cst_47 = arith.constant dense<0.000000e+00> : vector<8xf32>
    %139 = vector.multi_reduction <add>, %138, %cst_47 [1] : vector<8x128xf32> to vector<8xf32>
    %140 = vector.shape_cast %139 : vector<8xf32> to vector<8x1xf32>
    %141 = math.sqrt %140 : vector<8x1xf32>
    %cst_48 = arith.constant 9.99999974E-6 : f32
    %142 = vector.broadcast %cst_48 : f32 to vector<8x1xf32>
    %143 = arith.addf %141, %142 : vector<8x1xf32>
    %144 = vector.broadcast %143 : vector<8x1xf32> to vector<8x128xf32>
    %145 = arith.divf %137, %144 : vector<8x128xf32>
    %146 = arith.mulf %136, %145 : vector<8x128xf32>
    %cst_49 = arith.constant dense<0.000000e+00> : vector<8xf32>
    %147 = vector.multi_reduction <add>, %146, %cst_49 [1] : vector<8x128xf32> to vector<8xf32>
    %148 = vector.shape_cast %147 : vector<8xf32> to vector<8x1xf32>
    %cst_50 = arith.constant 2.000000e+00 : f32
    %149 = vector.broadcast %cst_50 : f32 to vector<8x1xf32>
    %150 = arith.mulf %149, %148 : vector<8x1xf32>
    %151 = vector.broadcast %150 : vector<8x1xf32> to vector<8x128xf32>
    %152 = arith.mulf %151, %145 : vector<8x128xf32>
    %153 = arith.subf %136, %152 : vector<8x128xf32>
    %c0_51 = arith.constant 0 : index
    %c0_52 = arith.constant 0 : index
    %154 = vector.load %arg8[%c0_51, %c0_52] : memref<8x128xf32, #tpu.memory_space<vmem>>, vector<8x128xf32>
    tpu.vector_store %arg8[%c0_51, %c0_52], %153 {strides = array<i32>} : memref<8x128xf32, #tpu.memory_space<vmem>>, vector<8x128xf32>,
    return
  }
  func.func @transform_0(%arg0: i32) -> (i32, i32) {
    %c0_i32 = arith.constant 0 : i32
    %c0_i32_0 = arith.constant 0 : i32
    return %arg0, %c0_i32 : i32, i32
  }
  func.func @transform_1(%arg0: i32) -> (i32, i32) {
    %c0_i32 = arith.constant 0 : i32
    %c0_i32_0 = arith.constant 0 : i32
    %c0_i32_1 = arith.constant 0 : i32
    return %c0_i32, %c0_i32_0 : i32, i32
  }
  func.func @transform_2(%arg0: i32) -> (i32, i32) {
    %c0_i32 = arith.constant 0 : i32
    %c0_i32_0 = arith.constant 0 : i32
    %c0_i32_1 = arith.constant 0 : i32
    return %c0_i32, %c0_i32_0 : i32, i32
  }
  func.func @transform_3(%arg0: i32) -> (i32, i32) {
    %c0_i32 = arith.constant 0 : i32
    %c0_i32_0 = arith.constant 0 : i32
    return %arg0, %c0_i32 : i32, i32
  }
  func.func @transform_4(%arg0: i32) -> (i32, i32) {
    %c0_i32 = arith.constant 0 : i32
    %c0_i32_0 = arith.constant 0 : i32
    return %arg0, %c0_i32 : i32, i32
  }
  func.func @transform_5(%arg0: i32) -> (i32, i32) {
    %c0_i32 = arith.constant 0 : i32
    %c0_i32_0 = arith.constant 0 : i32
    return %arg0, %c0_i32 : i32, i32
  }
  func.func @transform_6(%arg0: i32) -> (i32, i32) {
    %c0_i32 = arith.constant 0 : i32
    %c0_i32_0 = arith.constant 0 : i32
    return %arg0, %c0_i32 : i32, i32
  }
  func.func @transform_7(%arg0: i32) -> (i32, i32) {
    %c0_i32 = arith.constant 0 : i32
    %c0_i32_0 = arith.constant 0 : i32
    return %arg0, %c0_i32 : i32, i32
  }
}

</mosaic_0001>

<llo_original>
// kernel: tpu_custom_call.1
$region0: #{tpu_custom_call.1}
  #allocation0 [shape = 'u32[]', space=smem, size = 0x4, offset = 0x4, fixed_abs, tag = 'smem constant byte address 0x4 - core index']
  #allocation1 [shape = 'u32[72,128]{1,0:T(1,128)}', space=vmem, size = 0x9000, scoped, tag = 'internal scratch']
  %s0 = inlined_call_operand.hbm [shape: bf16[16,32], index: 0, kind: input, shape index: {}]
  %s1 = inlined_call_operand.hbm [shape: bf16[32,128], index: 1, kind: input, shape index: {}]
  %s2 = inlined_call_operand.vmem [shape: f32[1,128], index: 2, kind: input, shape index: {}]
  %s3 = inlined_call_operand.hbm [shape: bf16[16,32], index: 3, kind: input, shape index: {}]
  %s4 = inlined_call_operand.hbm [shape: bf16[16,32], index: 4, kind: input, shape index: {}]
  %s5 = inlined_call_operand.hbm [shape: bf16[16,128], index: 5, kind: input, shape index: {}]
  %s6 = inlined_call_operand.hbm [shape: f32[16,128], index: 6, kind: output, shape index: {0}]
  %s7 = inlined_call_operand.hbm [shape: f32[16,128], index: 7, kind: output, shape index: {1}]
  %8 = xla_tuple %s6, %s7
  %s9 = sld [smem:[#allocation0]]
  $region85: #{tpu_custom_call.1} parent=0
    _
  %s11 = ssub.s32 1, %s9
  %s12 = scalar_select 0, %s11, %s9
  $region1: #{tpu_custom_call.1} parent=0
    #allocation2 [shape = 'u8[4096]{0}', space=vmem, size = 0x1000, scoped, tag = 'input window, operand 0']
    #allocation3 [shape = 's32[2]{0}', space=sflag, size = 0x8, scoped, tag = 'scoped memory for tpu_custom_call.1']
    #allocation4 [shape = 's32[2]{0}', space=sflag, size = 0x8, scoped, tag = 'scoped memory for tpu_custom_call.1']
    #allocation5 [shape = 'u8[8192]{0}', space=vmem, size = 0x2000, scoped, tag = 'input window, operand 1, single buffered']
    #allocation6 [shape = 's32[1]{0}', space=sflag, size = 0x4, scoped, tag = 'scoped memory for tpu_custom_call.1']
    #allocation7 [shape = 'u8[4096]{0}', space=vmem, size = 0x1000, scoped, tag = 'input window, operand 3']
    #allocation8 [shape = 'u8[4096]{0}', space=vmem, size = 0x1000, scoped, tag = 'input window, operand 4']
    #allocation9 [shape = 'u8[4096]{0}', space=vmem, size = 0x1000, scoped, tag = 'input window, operand 5']
    #allocation10 [shape = 'u8[8192]{0}', space=vmem, size = 0x2000, scoped, tag = 'output window, operand 0']
    #allocation11 [shape = 'u8[8192]{0}', space=vmem, size = 0x2000, scoped, tag = 'output window, operand 1']
    #allocation12 [shape = 's32[2]{0}', space=sflag, size = 0x8, scoped, tag = 'scoped memory for tpu_custom_call.1']
    %13 = vsyncpa [#allocation3], 0
    %s14 = scalar_lea.sflag [#allocation3], 1
    %15 = vsyncpa %s14, 0
    %16 = vsyncpa [#allocation6], 0
    %17 = vsyncpa [#allocation4], 0
    %s18 = scalar_lea.sflag [#allocation4], 1
    %19 = vsyncpa %s18, 0
    %20 = vsyncpa [#allocation12], 0
    %s21 = scalar_lea.sflag [#allocation12], 1
    %22 = vsyncpa %s21, 0
    loop: start=0, step=1, limit=4
    $region2: #{tpu_custom_call.1} parent=1 // loop_pre_header
      _
    $region3: #{tpu_custom_call.1} parent=1 // loop_header
      %s24 = sphi 0, %s28
      %p25 = scmp.ge.s32.totalorder %s24, 4
      %s34 = sphi 0, %s36
      %s37 = sphi 0, %s34
      %s38 = sphi 0, %s37
      %s54 = sphi 0, %s38
      %s58 = sphi 0, %s58
      %s60 = sphi 0, %s58
      %s61 = sphi 0, %s60
      %s75 = sphi 0, %s61
      %s79 = sphi 0, %s79
      %s81 = sphi 0, %s79
      %s82 = sphi 0, %s81
      %s96 = sphi 0, %s82
      %s102 = sphi 0, %s104
      %s105 = sphi 0, %s102
      %s106 = sphi 0, %s105
      %s122 = sphi 0, %s106
      %s128 = sphi 0, %s130
      %s131 = sphi 0, %s128
      %s132 = sphi 0, %s131
      %s148 = sphi 0, %s132
      %s154 = sphi 0, %s156
      %s157 = sphi 0, %s154
      %s158 = sphi 0, %s157
      %s174 = sphi 0, %s158
      %s180 = sphi 0, %s182
      %s183 = sphi 0, %s180
      %s184 = sphi 0, %s183
      %s200 = sphi 0, %s184
      %s206 = sphi 0, %s208
      %s209 = sphi 0, %s206
      %s210 = sphi 0, %s209
      %s226 = sphi 0, %s210
    $region4: #{tpu_custom_call.1} parent=1 // loop_header_branch
      %27 = sbr.rel (%p25) target = $region8
    $region5: #{tpu_custom_call.1} parent=1 // loop_body
      %s29 = ssub.s32 %s24, 1
      %s30 = ssub.s32 %s24, 2
      %s31 = sadd.s32 %s24, 1
      %s32 = ssub.s32 %s24, %s31
      %p33 = scmp.eq.s32.totalorder %s32, 0
      %s35 = sadd.s32 %s34, 1
      %s36 = scalar_select %p33, %s34, %s35
      %p39 = pneg %p33
      %p40 = scmp.eq.s32.totalorder %s24, 1
      %p41 = por %p39, %p40
      %p42 = scmp.ne.s32.totalorder %s34, %s37
      %p43 = scmp.eq.s32.totalorder %s24, 0
      %p44 = por %p42, %p43
      %p45 = scmp.ne.s32.totalorder %s34, %s37
      %p46 = scmp.eq.s32.totalorder %s29, 1
      %p47 = por %p45, %p46
      %p48 = scmp.ne.s32.totalorder %s37, %s38
      %p49 = scmp.eq.s32.totalorder %s29, 0
      %p50 = por %p48, %p49
      %p51 = scmp.ne.s32.totalorder %s37, %s38
      %p52 = scmp.eq.s32.totalorder %s30, 1
      %p53 = por %p51, %p52
      %p55 = scmp.ne.s32.totalorder %s38, %s54
      %p56 = scmp.eq.s32.totalorder %s30, 0
      %p57 = por %p55, %p56
      %s59 = sadd.s32 %s58, 1
      %p62 = scmp.eq.s32.totalorder %s24, 1
      %p63 = scmp.ne.s32.totalorder %s58, %s60
      %p64 = scmp.eq.s32.totalorder %s24, 0
      %p65 = por %p63, %p64
      %p66 = scmp.ne.s32.totalorder %s58, %s60
      %p67 = scmp.eq.s32.totalorder %s29, 1
      %p68 = por %p66, %p67
      %p69 = scmp.ne.s32.totalorder %s60, %s61
      %p70 = scmp.eq.s32.totalorder %s29, 0
      %p71 = por %p69, %p70
      %p72 = scmp.ne.s32.totalorder %s60, %s61
      %p73 = scmp.eq.s32.totalorder %s30, 1
      %p74 = por %p72, %p73
      %p76 = scmp.ne.s32.totalorder %s61, %s75
      %p77 = scmp.eq.s32.totalorder %s30, 0
      %p78 = por %p76, %p77
      %s80 = sadd.s32 %s79, 1
      %p83 = scmp.eq.s32.totalorder %s24, 1
      %p84 = scmp.ne.s32.totalorder %s79, %s81
      %p85 = scmp.eq.s32.totalorder %s24, 0
      %p86 = por %p84, %p85
      %p87 = scmp.ne.s32.totalorder %s79, %s81
      %p88 = scmp.eq.s32.totalorder %s29, 1
      %p89 = por %p87, %p88
      %p90 = scmp.ne.s32.totalorder %s81, %s82
      %p91 = scmp.eq.s32.totalorder %s29, 0
      %p92 = por %p90, %p91
      %p93 = scmp.ne.s32.totalorder %s81, %s82
      %p94 = scmp.eq.s32.totalorder %s30, 1
      %p95 = por %p93, %p94
      %p97 = scmp.ne.s32.totalorder %s82, %s96
      %p98 = scmp.eq.s32.totalorder %s30, 0
      %p99 = por %p97, %p98
      %s100 = ssub.s32 %s24, %s31
      %p101 = scmp.eq.s32.totalorder %s100, 0
      %s103 = sadd.s32 %s102, 1
      %s104 = scalar_select %p101, %s102, %s103
      %p107 = pneg %p101
      %p108 = scmp.eq.s32.totalorder %s24, 1
      %p109 = por %p107, %p108
      %p110 = scmp.ne.s32.totalorder %s102, %s105
      %p111 = scmp.eq.s32.totalorder %s24, 0
      %p112 = por %p110, %p111
      %p113 = scmp.ne.s32.totalorder %s102, %s105
      %p114 = scmp.eq.s32.totalorder %s29, 1
      %p115 = por %p113, %p114
      %p116 = scmp.ne.s32.totalorder %s105, %s106
      %p117 = scmp.eq.s32.totalorder %s29, 0
      %p118 = por %p116, %p117
      %p119 = scmp.ne.s32.totalorder %s105, %s106
      %p120 = scmp.eq.s32.totalorder %s30, 1
      %p121 = por %p119, %p120
      %p123 = scmp.ne.s32.totalorder %s106, %s122
      %p124 = scmp.eq.s32.totalorder %s30, 0
      %p125 = por %p123, %p124
      %s126 = ssub.s32 %s24, %s31
      %p127 = scmp.eq.s32.totalorder %s126, 0
      %s129 = sadd.s32 %s128, 1
      %s130 = scalar_select %p127, %s128, %s129
      %p133 = pneg %p127
      %p134 = scmp.eq.s32.totalorder %s24, 1
      %p135 = por %p133, %p134
      %p136 = scmp.ne.s32.totalorder %s128, %s131
      %p137 = scmp.eq.s32.totalorder %s24, 0
      %p138 = por %p136, %p137
      %p139 = scmp.ne.s32.totalorder %s128, %s131
      %p140 = scmp.eq.s32.totalorder %s29, 1
      %p141 = por %p139, %p140
      %p142 = scmp.ne.s32.totalorder %s131, %s132
      %p143 = scmp.eq.s32.totalorder %s29, 0
      %p144 = por %p142, %p143
      %p145 = scmp.ne.s32.totalorder %s131, %s132
      %p146 = scmp.eq.s32.totalorder %s30, 1
      %p147 = por %p145, %p146
      %p149 = scmp.ne.s32.totalorder %s132, %s148
      %p150 = scmp.eq.s32.totalorder %s30, 0
      %p151 = por %p149, %p150
      %s152 = ssub.s32 %s24, %s31
      %p153 = scmp.eq.s32.totalorder %s152, 0
      %s155 = sadd.s32 %s154, 1
      %s156 = scalar_select %p153, %s154, %s155
      %p159 = pneg %p153
      %p160 = scmp.eq.s32.totalorder %s24, 1
      %p161 = por %p159, %p160
      %p162 = scmp.ne.s32.totalorder %s154, %s157
      %p163 = scmp.eq.s32.totalorder %s24, 0
      %p164 = por %p162, %p163
      %p165 = scmp.ne.s32.totalorder %s154, %s157
      %p166 = scmp.eq.s32.totalorder %s29, 1
      %p167 = por %p165, %p166
      %p168 = scmp.ne.s32.totalorder %s157, %s158
      %p169 = scmp.eq.s32.totalorder %s29, 0
      %p170 = por %p168, %p169
      %p171 = scmp.ne.s32.totalorder %s157, %s158
      %p172 = scmp.eq.s32.totalorder %s30, 1
      %p173 = por %p171, %p172
      %p175 = scmp.ne.s32.totalorder %s158, %s174
      %p176 = scmp.eq.s32.totalorder %s30, 0
      %p177 = por %p175, %p176
      %s178 = ssub.s32 %s24, %s31
      %p179 = scmp.eq.s32.totalorder %s178, 0
      %s181 = sadd.s32 %s180, 1
      %s182 = scalar_select %p179, %s180, %s181
      %p185 = pneg %p179
      %p186 = scmp.eq.s32.totalorder %s24, 1
      %p187 = por %p185, %p186
      %p188 = scmp.ne.s32.totalorder %s180, %s183
      %p189 = scmp.eq.s32.totalorder %s24, 0
      %p190 = por %p188, %p189
      %p191 = scmp.ne.s32.totalorder %s180, %s183
      %p192 = scmp.eq.s32.totalorder %s29, 1
      %p193 = por %p191, %p192
      %p194 = scmp.ne.s32.totalorder %s183, %s184
      %p195 = scmp.eq.s32.totalorder %s29, 0
      %p196 = por %p194, %p195
      %p197 = scmp.ne.s32.totalorder %s183, %s184
      %p198 = scmp.eq.s32.totalorder %s30, 1
      %p199 = por %p197, %p198
      %p201 = scmp.ne.s32.totalorder %s184, %s200
      %p202 = scmp.eq.s32.totalorder %s30, 0
      %p203 = por %p201, %p202
      %s204 = ssub.s32 %s24, %s31
      %p205 = scmp.eq.s32.totalorder %s204, 0
      %s207 = sadd.s32 %s206, 1
      %s208 = scalar_select %p205, %s206, %s207
      %p211 = pneg %p205
      %p212 = scmp.eq.s32.totalorder %s24, 1
      %p213 = por %p211, %p212
      %p214 = scmp.ne.s32.totalorder %s206, %s209
      %p215 = scmp.eq.s32.totalorder %s24, 0
      %p216 = por %p214, %p215
      %p217 = scmp.ne.s32.totalorder %s206, %s209
      %p218 = scmp.eq.s32.totalorder %s29, 1
      %p219 = por %p217, %p218
      %p220 = scmp.ne.s32.totalorder %s209, %s210
      %p221 = scmp.eq.s32.totalorder %s29, 0
      %p222 = por %p220, %p221
      %p223 = scmp.ne.s32.totalorder %s209, %s210
      %p224 = scmp.eq.s32.totalorder %s30, 1
      %p225 = por %p223, %p224
      %p227 = scmp.ne.s32.totalorder %s210, %s226
      %p228 = scmp.eq.s32.totalorder %s30, 0
      %p229 = por %p227, %p228
      %p230 = scmp.le.s32.totalorder 1, %s24
      %p231 = scmp.lt.s32.totalorder %s24, 3
      %p232 = pnand %p230, %p231
      %p233 = pneg %p232
      // Predicated region
      $region9: #{tpu_custom_call.1} parent=5 // pred_check
        _
      $region10: #{tpu_custom_call.1} parent=5 // pred_check_branch
        %235 = sbr.rel (%p232) target = $region12
      $region11: #{tpu_custom_call.1} parent=5 // pred_region
        %s236 = ssub.s32 %s24, 1
        // Predicated region
        $region13: #{tpu_custom_call.1} parent=11 // pred_check
          %p237 = pneg %p71
        $region14: #{tpu_custom_call.1} parent=11 // pred_check_branch
          %239 = sbr.rel (%p237) target = $region16
        $region15: #{tpu_custom_call.1} parent=11 // pred_region
          %241 = vsyncadd [#allocation6], 0
          %s242 = sshll.u32 %s1, 4
          %s243 = int_to_ptr.hbm [resolvable:$true] %s242
          %s244 = sshll.u32 [#allocation5], 4
          %s245 = int_to_ptr.vmem [resolvable:$true] %s244
          %250 = dma.hbm_to_vmem [thread:$0]  %s243, 256, %s245, [#allocation6], 64, 64, 4
        $region16: #{tpu_custom_call.1} parent=11 // pred_fallthru
          _
        // Predicated region
        $region17: #{tpu_custom_call.1} parent=11 // pred_check
          %p251 = pneg %p92
        $region18: #{tpu_custom_call.1} parent=11 // pred_check_branch
          %253 = sbr.rel (%p251) target = $region20
        $region19: #{tpu_custom_call.1} parent=11 // pred_region
          _
        $region20: #{tpu_custom_call.1} parent=11 // pred_fallthru
          _
      $region12: #{tpu_custom_call.1} parent=5 // pred_fallthru
        _
      %p254 = scmp.lt.s32.totalorder %s24, 2
      // Predicated region
      $region21: #{tpu_custom_call.1} parent=5 // pred_check
        %p255 = pneg %p254
      $region22: #{tpu_custom_call.1} parent=5 // pred_check_branch
        %257 = sbr.rel (%p255) target = $region24
      $region23: #{tpu_custom_call.1} parent=5 // pred_region
        // Predicated region
        $region25: #{tpu_custom_call.1} parent=23 // pred_check
          %p258 = pneg %p44
        $region26: #{tpu_custom_call.1} parent=23 // pred_check_branch
          %260 = sbr.rel (%p258) target = $region28
        $region27: #{tpu_custom_call.1} parent=23 // pred_region
          %s261 = sand.u32 %s24, 1
          %s262 = scalar_lea.sflag [#allocation3], %s261
          %s263 = sand.u32 %s34, 1
          %s264 = smul.addr %s263, 4
          %s265 = scalar_lea.vmem [#allocation2], %s264
          %267 = vsyncadd %s262, 0
          %s268 = smul.addr %s24, 4
          %s269 = scalar_lea.hbm %s0, %s268
          %s271 = sshll.u32 %s269, 4
          %s272 = int_to_ptr.hbm [resolvable:$true] %s271
          %s273 = sshll.u32 %s265, 4
          %s274 = int_to_ptr.vmem [resolvable:$true] %s273
          %276 = dma.hbm_to_vmem [thread:$0]  %s272, 64, %s274, %s262
        $region28: #{tpu_custom_call.1} parent=23 // pred_fallthru
          _
        // Predicated region
        $region29: #{tpu_custom_call.1} parent=23 // pred_check
          %p277 = pneg %p112
        $region30: #{tpu_custom_call.1} parent=23 // pred_check_branch
          %279 = sbr.rel (%p277) target = $region32
        $region31: #{tpu_custom_call.1} parent=23 // pred_region
          %s280 = sand.u32 %s24, 1
          %s281 = scalar_lea.sflag [#allocation3], %s280
          %s282 = sand.u32 %s102, 1
          %s283 = smul.addr %s282, 4
          %s284 = scalar_lea.vmem [#allocation7], %s283
          %286 = vsyncadd %s281, 0
          %s287 = smul.addr %s24, 4
          %s288 = scalar_lea.hbm %s3, %s287
          %s290 = sshll.u32 %s288, 4
          %s291 = int_to_ptr.hbm [resolvable:$true] %s290
          %s292 = sshll.u32 %s284, 4
          %s293 = int_to_ptr.vmem [resolvable:$true] %s292
          %295 = dma.hbm_to_vmem [thread:$0]  %s291, 64, %s293, %s281
        $region32: #{tpu_custom_call.1} parent=23 // pred_fallthru
          _
        // Predicated region
        $region33: #{tpu_custom_call.1} parent=23 // pred_check
          %p296 = pneg %p138
        $region34: #{tpu_custom_call.1} parent=23 // pred_check_branch
          %298 = sbr.rel (%p296) target = $region36
        $region35: #{tpu_custom_call.1} parent=23 // pred_region
          %s299 = sand.u32 %s24, 1
          %s300 = scalar_lea.sflag [#allocation3], %s299
          %s301 = sand.u32 %s128, 1
          %s302 = smul.addr %s301, 4
          %s303 = scalar_lea.vmem [#allocation8], %s302
          %305 = vsyncadd %s300, 0
          %s306 = smul.addr %s24, 4
          %s307 = scalar_lea.hbm %s4, %s306
          %s309 = sshll.u32 %s307, 4
          %s310 = int_to_ptr.hbm [resolvable:$true] %s309
          %s311 = sshll.u32 %s303, 4
          %s312 = int_to_ptr.vmem [resolvable:$true] %s311
          %314 = dma.hbm_to_vmem [thread:$0]  %s310, 64, %s312, %s300
        $region36: #{tpu_custom_call.1} parent=23 // pred_fallthru
          _
        // Predicated region
        $region37: #{tpu_custom_call.1} parent=23 // pred_check
          %p315 = pneg %p164
        $region38: #{tpu_custom_call.1} parent=23 // pred_check_branch
          %317 = sbr.rel (%p315) target = $region40
        $region39: #{tpu_custom_call.1} parent=23 // pred_region
          %s318 = sand.u32 %s24, 1
          %s319 = scalar_lea.sflag [#allocation3], %s318
          %s320 = sand.u32 %s154, 1
          %s321 = smul.addr %s320, 4
          %s322 = scalar_lea.vmem [#allocation9], %s321
          %324 = vsyncadd %s319, 0
          %s325 = smul.addr %s24, 4
          %s326 = scalar_lea.hbm %s5, %s325
          %s328 = sshll.u32 %s326, 4
          %s329 = int_to_ptr.hbm [resolvable:$true] %s328
          %s330 = sshll.u32 %s322, 4
          %s331 = int_to_ptr.vmem [resolvable:$true] %s330
          %333 = dma.hbm_to_vmem [thread:$0]  %s329, 64, %s331, %s319
        $region40: #{tpu_custom_call.1} parent=23 // pred_fallthru
          _
      $region24: #{tpu_custom_call.1} parent=5 // pred_fallthru
        _
      %p334 = scmp.le.s32.totalorder 1, %s24
      %p335 = scmp.lt.s32.totalorder %s24, 3
      %p336 = pnand %p334, %p335
      %p337 = pneg %p336
      // Predicated region
      $region41: #{tpu_custom_call.1} parent=5 // pred_check
        _
      $region42: #{tpu_custom_call.1} parent=5 // pred_check_branch
        %339 = sbr.rel (%p336) target = $region44
      $region43: #{tpu_custom_call.1} parent=5 // pred_region
        %s340 = ssub.s32 %s24, 1
        %s341 = sand.u32 %s29, 1
        %s342 = scalar_lea.sflag [#allocation3], %s341
        %s343 = sand.u32 %s37, 1
        %s344 = smul.addr %s343, 4
        %s345 = scalar_lea.vmem [#allocation2], %s344
        // Predicated region
        $region45: #{tpu_custom_call.1} parent=43 // pred_check
          %p346 = pneg %p50
        $region46: #{tpu_custom_call.1} parent=43 // pred_check_branch
          %348 = sbr.rel (%p346) target = $region48
        $region47: #{tpu_custom_call.1} parent=43 // pred_region
          %350 = dma.done %s342, 64
        $region48: #{tpu_custom_call.1} parent=43 // pred_fallthru
          _
        // Predicated region
        $region49: #{tpu_custom_call.1} parent=43 // pred_check
          %p351 = pneg %p71
        $region50: #{tpu_custom_call.1} parent=43 // pred_check_branch
          %353 = sbr.rel (%p351) target = $region52
        $region51: #{tpu_custom_call.1} parent=43 // pred_region
          %355 = dma.done [#allocation6], 256
        $region52: #{tpu_custom_call.1} parent=43 // pred_fallthru
          _
        %s356 = sand.u32 %s29, 1
        %s357 = scalar_lea.sflag [#allocation3], %s356
        %s358 = sand.u32 %s105, 1
        %s359 = smul.addr %s358, 4
        %s360 = scalar_lea.vmem [#allocation7], %s359
        // Predicated region
        $region53: #{tpu_custom_call.1} parent=43 // pred_check
          %p361 = pneg %p118
        $region54: #{tpu_custom_call.1} parent=43 // pred_check_branch
          %363 = sbr.rel (%p361) target = $region56
        $region55: #{tpu_custom_call.1} parent=43 // pred_region
          %365 = dma.done %s357, 64
        $region56: #{tpu_custom_call.1} parent=43 // pred_fallthru
          _
        %s366 = sand.u32 %s29, 1
        %s367 = scalar_lea.sflag [#allocation3], %s366
        %s368 = sand.u32 %s131, 1
        %s369 = smul.addr %s368, 4
        %s370 = scalar_lea.vmem [#allocation8], %s369
        // Predicated region
        $region57: #{tpu_custom_call.1} parent=43 // pred_check
          %p371 = pneg %p144
        $region58: #{tpu_custom_call.1} parent=43 // pred_check_branch
          %373 = sbr.rel (%p371) target = $region60
        $region59: #{tpu_custom_call.1} parent=43 // pred_region
          %375 = dma.done %s367, 64
        $region60: #{tpu_custom_call.1} parent=43 // pred_fallthru
          _
        %s376 = sand.u32 %s29, 1
        %s377 = scalar_lea.sflag [#allocation3], %s376
        %s378 = sand.u32 %s157, 1
        %s379 = smul.addr %s378, 4
        %s380 = scalar_lea.vmem [#allocation9], %s379
        // Predicated region
        $region61: #{tpu_custom_call.1} parent=43 // pred_check
          %p381 = pneg %p170
        $region62: #{tpu_custom_call.1} parent=43 // pred_check_branch
          %383 = sbr.rel (%p381) target = $region64
        $region63: #{tpu_custom_call.1} parent=43 // pred_region
          %385 = dma.done %s377, 64
        $region64: #{tpu_custom_call.1} parent=43 // pred_fallthru
          _
        %s386 = sand.u32 %s29, 1
        %s387 = scalar_lea.sflag [#allocation3], %s386
        %s388 = sand.u32 %s37, 1
        %s389 = smul.addr %s388, 4
        %s390 = scalar_lea.vmem [#allocation2], %s389
        %p391 = pneg %p50
        %p392 = pneg %p47
        %p393 = pneg %p71
        %p394 = pneg %p68
        %p395 = pneg %p92
        %p396 = pneg %p89
        %s397 = sand.u32 %s29, 1
        %s398 = scalar_lea.sflag [#allocation3], %s397
        %s399 = sand.u32 %s105, 1
        %s400 = smul.addr %s399, 4
        %s401 = scalar_lea.vmem [#allocation7], %s400
        %p402 = pneg %p118
        %p403 = pneg %p115
        %s404 = sand.u32 %s29, 1
        %s405 = scalar_lea.sflag [#allocation3], %s404
        %s406 = sand.u32 %s131, 1
        %s407 = smul.addr %s406, 4
        %s408 = scalar_lea.vmem [#allocation8], %s407
        %p409 = pneg %p144
        %p410 = pneg %p141
        %s411 = sand.u32 %s29, 1
        %s412 = scalar_lea.sflag [#allocation3], %s411
        %s413 = sand.u32 %s157, 1
        %s414 = smul.addr %s413, 4
        %s415 = scalar_lea.vmem [#allocation9], %s414
        %p416 = pneg %p170
        %p417 = pneg %p167
        %p418 = pneg %p196
        %p419 = pneg %p193
        %s420 = sand.u32 %s183, 1
        %s421 = scalar_lea.sflag [#allocation4], %s420
        %s422 = sand.u32 %s183, 1
        %s423 = smul.addr %s422, 8
        %s424 = scalar_lea.vmem [#allocation10], %s423
        %p425 = pneg %p222
        %p426 = pneg %p219
        %s427 = sand.u32 %s209, 1
        %s428 = scalar_lea.sflag [#allocation12], %s427
        %s429 = sand.u32 %s209, 1
        %s430 = smul.addr %s429, 8
        %s431 = scalar_lea.vmem [#allocation11], %s430
        %v433 = vld [vmem:[%s345] sm:$0xf]
        %v434 = vld [vmem:[#allocation5] sm:$0xf]
        %v435 = vld [vmem:[#allocation5 + $0x4] sm:$0xf]
        %v436 = vld [vmem:[#allocation5 + $0x8] sm:$0xf]
        %v437 = vld [vmem:[#allocation5 + $0xc] sm:$0xf]
        %v438 = vld [vmem:[%s2] sm:$0x1]
        %v440 = vperm.slane %v438, 0
        %v446 = vunpack.c.l.b16 %v434
        %v447 = vunpack.c.l.b16 %v435
        %v448 = vunpack.c.l.b16 %v436
        %v449 = vunpack.c.l.b16 %v437
        %v450 = vpack.c.b16 %v447, %v446
        %v451 = vpack.c.b16 %v449, %v448
        %vm454 = vcmask 261120
        %v456 = vsel %vm454, %v433, 0
        %458 = vmatpush.bf16.msra.mxu0 0
        %459 = vmatpush.bf16.msra.mxu0 0
        %460 = vmatpush.bf16.msra.mxu0 0
        %461 = vmatpush.bf16.msra.mxu0 0
        %462 = vmatpush.bf16.msra.mxu0 0
        %463 = vmatpush.bf16.msra.mxu0 0
        %464 = vmatpush.bf16.msra.mxu0 %v451
        %465 = vmatpush.bf16.msra.mxu0 %v450
        %466 = vmatmul.bf16.gmra.mxu0 %v456
        %v467 = vpop.f32.mrf.mxu0
        %v468 = vadd.f32 %v440, %v467
        %v469 = vpop.f32.mrf.mxu0
        %470 = vdwg.mxu0
        %v471 = vlaneseq
        %v472 = vand.u32 %v471, 127
        %vm473 = vcmp.eq.s32.totalorder %v472, 32
        %v474 = vsel %vm473, 0.0, %v468
        %v475 = vmul.f32 %v474, %v474
        %476 = vadd.xlane.f32.xlu0 %v475
        %v477 = vpop.xlane.xlu0 %476
        %v478 = vrsqrt.pop %v477
        %v479 = vmul.f32 %v478, %v477
        %v480 = vmul.f32 %v479, %v478
        %v481 = vmul.f32 0.5, %v480
        %v482 = vsub.f32 1.5, %v481
        %v483 = vmul.f32 %v478, %v482
        %vm484 = vweird.f32 %v477
        %vm485 = vweird.f32 %v478
        %vm486 = vmor %vm484, %vm485
        %v487 = vsel %vm486, %v478, %v483
        %v488 = vmul.f32 %v474, %v487
        %v489 = vmax.f32 %v468, 0.0
        %v490 = vand.u32 2147483647, %v468
        %v491 = vsub.f32 0.0, %v490
        %v492 = vmul.f32 %v491, 1.442695
        %v493 = vpow.pop %v492
        %v494 = vadd.f32 %v493, 1.0
        %v495 = vlog2.pop %v494
        %v496 = vmul.f32 %v495, 0.6931472
        %v497 = vmul.f32 -0.5, %v493
        %v498 = vadd.f32 %v497, 1.0
        %v499 = vmul.f32 %v498, %v493
        %v500 = vand.u32 2147483647, %v493
        %vm501 = vcmp.lt.f32.partialorder %v500, 0.0004427343
        %v502 = vsel %vm501, %v499, %v496
        %v503 = vadd.f32 %v489, %v502
        %v504 = vadd.f32 %v503, 1.0
        %506 = vset.pattern.permute.xlu0 32
        %507 = vperm.xlu0 %506, %v504
        %v508 = vpop.permute.xlu0 %507
        %v510 = vsel %vm473, %v508, %v488
        %511 = vst [vmem:[%s424] sm:$0xff] %v510
        %v512 = vmul.f32 %v504, 4.0
        %v513 = vmul.f32 %v512, %v504
        %v514 = vadd.f32 %v513, 961.0
        %v515 = vrsqrt.pop %v514
        %v516 = vmul.f32 %v515, %v514
        %v517 = vmul.f32 %v516, %v515
        %v518 = vmul.f32 0.5, %v517
        %v519 = vsub.f32 1.5, %v518
        %v520 = vmul.f32 %v515, %v519
        %v521 = vmul.f32 %v514, %v520
        %vm522 = vcmp.eq.f32.partialorder %v514, inf
        %v523 = vsel %vm522, %v514, %v521
        %vm524 = vcmp.eq.f32.partialorder %v514, 0.0
        %v525 = vand.u32 %v514, 2147483648
        %v526 = vsel %vm524, %v525, %v523
        %v527 = vmul.f32 %v504, 2.0
        %v528 = vsub.f32 %v526, %v527
        %v529 = vmul.f32 %v528, 0.032258064
        %v530 = vrcp.pop %v504
        %v531 = vmul.f32 %v504, %v530
        %v532 = vsub.f32 1.0, %v531
        %v533 = vmul.f32 %v530, %v532
        %v534 = vadd.f32 %v530, %v533
        %vm535 = vweird.f32 %v504
        %vm536 = vweird.f32 %v530
        %vm537 = vmor %vm535, %vm536
        %v538 = vsel %vm537, %v530, %v534
        %v539 = vand.u32 2147483647, %v504
        %vm540 = vcmp.eq.f32.partialorder %v539, 8.507059e+37
        %v541 = vand.u32 %v504, 2147483648
        %v542 = vor.u32 1.1754944e-38, %v541
        %v543 = vsel %vm540, %v542, %v538
        %v544 = vmul.f32 7.75, %v543
        %v545 = vsub.f32 %v504, 10.0
        %v546 = vmax.f32 %v545, 0.0
        %v547 = vmin.f32 %v546, 1.0
        %v548 = vmul.f32 %v544, %v547
        %v549 = vsub.f32 1.0, %v547
        %v550 = vmul.f32 %v529, %v549
        %v551 = vadd.f32 %v548, %v550
        %v552 = vadd.f32 %v527, 31.0
        %v553 = vadd.f32 %v552, %v526
        %v554 = vmul.f32 %v553, 0.25
        %v555 = vmul.f32 %v554, 2.0
        %v556 = vmul.f32 %v555, %v551
        %v557 = vmul.f32 %v556, 2.0
        %v558 = vadd.f32 %v551, 1.0
        %v559 = vrcp.pop %v558
        %v560 = vmul.f32 %v558, %v559
        %v561 = vsub.f32 1.0, %v560
        %v562 = vmul.f32 %v559, %v561
        %v563 = vadd.f32 %v559, %v562
        %vm564 = vweird.f32 %v558
        %vm565 = vweird.f32 %v559
        %vm566 = vmor %vm564, %vm565
        %v567 = vsel %vm566, %v559, %v563
        %v568 = vand.u32 2147483647, %v558
        %vm569 = vcmp.eq.f32.partialorder %v568, 8.507059e+37
        %v570 = vand.u32 %v558, 2147483648
        %v571 = vor.u32 1.1754944e-38, %v570
        %v572 = vsel %vm569, %v571, %v567
        %v573 = vmul.f32 %v557, %v572
        %v574 = vsub.f32 %v573, 106.453606
        %v575 = vld [vmem:[%s360] sm:$0xf]
        %v576 = vunpack.c.l.bf16 %v575
        %v577 = vld [vmem:[%s370] sm:$0xf]
        %v578 = vunpack.c.l.bf16 %v577
        %v579 = vsub.f32 1.0, %v551
        %581 = vset.pattern.permute.xlu0 32
        %582 = vperm.xlu0 %581, %v579
        %v583 = vpop.permute.xlu0 %582
        %v585 = vmul.f32 %v583, %v576
        %v586 = vsub.f32 1.0, %v585
        %v587 = vrcp.pop %v586
        %v588 = vmul.f32 %v586, %v587
        %v589 = vsub.f32 1.0, %v588
        %v590 = vmul.f32 %v587, %v589
        %v591 = vadd.f32 %v587, %v590
        %vm592 = vweird.f32 %v586
        %vm593 = vweird.f32 %v587
        %vm594 = vmor %vm592, %vm593
        %v595 = vsel %vm594, %v587, %v591
        %v596 = vand.u32 2147483647, %v586
        %vm597 = vcmp.eq.f32.partialorder %v596, 8.507059e+37
        %v598 = vand.u32 %v586, 2147483648
        %v599 = vor.u32 1.1754944e-38, %v598
        %v600 = vsel %vm597, %v599, %v595
        %v601 = vmul.f32 1.0, %v600
        %603 = vset.pattern.permute.xlu0 32
        %604 = vperm.xlu0 %603, %v558
        %v605 = vpop.permute.xlu0 %604
        %v607 = vmul.f32 %v605, %v576
        %v608 = vsub.f32 1.0, %v607
        %v609 = vmul.f32 %v608, %v601
        %611 = vset.pattern.permute.xlu0 32
        %612 = vperm.xlu0 %611, %v556
        %v613 = vpop.permute.xlu0 %612
        %v615 = vmul.f32 %v613, %v601
        %v616 = vlog2.pop %v615
        %v617 = vmul.f32 %v616, 0.6931472
        %v618 = vmul.f32 %v617, 31.0
        %v619 = vsub.f32 %v618, %v615
        %621 = vset.pattern.permute.xlu0 32
        %622 = vperm.xlu0 %621, %v574
        %v623 = vpop.permute.xlu0 %622
        %v625 = vadd.f32 %v619, %v623
        %vm626 = vcmp.gt.f32.partialorder %v625, %v578
        %v627 = vsel %vm626, %v472, 32
        %v628 = vsel %vm454, %v627, 2147483647
        %v629 = vand.u32 %v628, 65535
        %v630 = vshra.s32 %v628, 16
        %v631 = vcvt.s32.f32 %v629
        %v632 = vcvt.s32.f32 %v630
        %633 = vmin.xlane.f32.xlu0 %v632
        %v634 = vpop.xlane.xlu0 %633
        %vm635 = vcmp.eq.f32.partialorder %v632, %v634
        %v636 = vsel %vm635, %v631, inf
        %637 = vmin.xlane.f32.xlu0 %v636
        %v638 = vpop.xlane.xlu0 %637
        %v639 = vcvt.f32.s32 %v638
        %v640 = vcvt.f32.s32 %v634
        %v641 = vshll.u32 %v640, 16
        %v642 = vadd.s32 %v641, %v639
        %vm643 = vcmp.lt.s32.totalorder %v642, 31
        %v644 = vsel %vm643, %v642, 31
        %vm645 = vcmp.eq.s32.totalorder %v472, %v644
        %v646 = vsel %vm645, %v609, 0.0
        %v647 = vsel %vm454, %v646, 0.0
        %648 = vadd.xlane.f32.xlu0 %v647
        %v649 = vpop.xlane.xlu0 %648
        %v650 = vmul.f32 %v649, %v649
        %v651 = vsub.f32 1.0, %v650
        %v652 = vmax.f32 %v651, 1e-10
        %v653 = vrsqrt.pop %v652
        %v654 = vmul.f32 %v653, %v652
        %v655 = vmul.f32 %v654, %v653
        %v656 = vmul.f32 0.5, %v655
        %v657 = vsub.f32 1.5, %v656
        %v658 = vmul.f32 %v653, %v657
        %v659 = vmul.f32 %v652, %v658
        %vm660 = vcmp.eq.f32.partialorder %v652, inf
        %v661 = vsel %vm660, %v652, %v659
        %vm662 = vcmp.eq.f32.partialorder %v652, 0.0
        %v663 = vand.u32 %v652, 2147483648
        %v664 = vsel %vm662, %v663, %v661
        %v665 = vld [vmem:[%s380] sm:$0xf]
        %v666 = vunpack.c.l.bf16 %v665
        %v667 = vmul.f32 %v666, %v666
        %668 = vadd.xlane.f32.xlu0 %v667
        %v669 = vpop.xlane.xlu0 %668
        %v670 = vrsqrt.pop %v669
        %v671 = vmul.f32 %v670, %v669
        %v672 = vmul.f32 %v671, %v670
        %v673 = vmul.f32 0.5, %v672
        %v674 = vsub.f32 1.5, %v673
        %v675 = vmul.f32 %v670, %v674
        %vm676 = vweird.f32 %v669
        %vm677 = vweird.f32 %v670
        %vm678 = vmor %vm676, %vm677
        %v679 = vsel %vm678, %v670, %v675
        %v680 = vmul.f32 %v666, %v679
        %vm681 = vcmp.eq.s32.totalorder %v472, 0
        %v682 = vsel %vm681, 1, 0
        %v683 = vcvt.s32.f32 %v682
        %v684 = vmul.f32 %v649, %v683
        %v685 = vmul.f32 %v664, %v680
        %v686 = vadd.f32 %v684, %v685
        %v687 = vsub.f32 %v683, %v488
        %v688 = vmul.f32 %v687, %v687
        %689 = vadd.xlane.f32.xlu0 %v688
        %v690 = vpop.xlane.xlu0 %689
        %v691 = vrsqrt.pop %v690
        %v692 = vmul.f32 %v691, %v690
        %v693 = vmul.f32 %v692, %v691
        %v694 = vmul.f32 0.5, %v693
        %v695 = vsub.f32 1.5, %v694
        %v696 = vmul.f32 %v691, %v695
        %v697 = vmul.f32 %v690, %v696
        %vm698 = vcmp.eq.f32.partialorder %v690, inf
        %v699 = vsel %vm698, %v690, %v697
        %vm700 = vcmp.eq.f32.partialorder %v690, 0.0
        %v701 = vand.u32 %v690, 2147483648
        %v702 = vsel %vm700, %v701, %v699
        %v703 = vadd.f32 %v702, 1e-05
        %v704 = vrcp.pop %v703
        %v705 = vmul.f32 %v703, %v704
        %v706 = vsub.f32 1.0, %v705
        %v707 = vmul.f32 %v704, %v706
        %v708 = vadd.f32 %v704, %v707
        %vm709 = vweird.f32 %v703
        %vm710 = vweird.f32 %v704
        %vm711 = vmor %vm709, %vm710
        %v712 = vsel %vm711, %v704, %v708
        %v713 = vand.u32 2147483647, %v703
        %vm714 = vcmp.eq.f32.partialorder %v713, 8.507059e+37
        %v715 = vand.u32 %v703, 2147483648
        %v716 = vor.u32 1.1754944e-38, %v715
        %v717 = vsel %vm714, %v716, %v712
        %v718 = vmul.f32 %v687, %v717
        %v719 = vmul.f32 %v686, %v718
        %720 = vadd.xlane.f32.xlu0 %v719
        %v721 = vpop.xlane.xlu0 %720
        %v722 = vmul.f32 %v721, 2.0
        %v723 = vmul.f32 %v722, %v718
        %v724 = vsub.f32 %v686, %v723
        %725 = vst [vmem:[%s431] sm:$0xff] %v724
        %s726 = sand.u32 %s183, 1
        %s727 = scalar_lea.sflag [#allocation4], %s726
        %s728 = sand.u32 %s183, 1
        %s729 = smul.addr %s728, 8
        %s730 = scalar_lea.vmem [#allocation10], %s729
        %s731 = sand.u32 %s209, 1
        %s732 = scalar_lea.sflag [#allocation12], %s731
        %s733 = sand.u32 %s209, 1
        %s734 = smul.addr %s733, 8
        %s735 = scalar_lea.vmem [#allocation11], %s734
        // Predicated region
        $region65: #{tpu_custom_call.1} parent=43 // pred_check
          %p736 = pneg %p193
        $region66: #{tpu_custom_call.1} parent=43 // pred_check_branch
          %738 = sbr.rel (%p736) target = $region68
        $region67: #{tpu_custom_call.1} parent=43 // pred_region
          %740 = vsyncadd %s727, 0
          %s741 = smul.addr %s29, 8
          %s742 = scalar_lea.hbm %s6, %s741
          %s744 = sshll.u32 %s730, 4
          %s745 = int_to_ptr.vmem [resolvable:$true] %s744
          %s746 = sshll.u32 %s742, 4
          %s747 = int_to_ptr.hbm [resolvable:$true] %s746
          %749 = dma.vmem_to_hbm [thread:$0]  %s745, 128, %s747, %s727
        $region68: #{tpu_custom_call.1} parent=43 // pred_fallthru
          _
        // Predicated region
        $region69: #{tpu_custom_call.1} parent=43 // pred_check
          %p750 = pneg %p219
        $region70: #{tpu_custom_call.1} parent=43 // pred_check_branch
          %752 = sbr.rel (%p750) target = $region72
        $region71: #{tpu_custom_call.1} parent=43 // pred_region
          %754 = vsyncadd %s732, 0
          %s755 = smul.addr %s29, 8
          %s756 = scalar_lea.hbm %s7, %s755
          %s758 = sshll.u32 %s735, 4
          %s759 = int_to_ptr.vmem [resolvable:$true] %s758
          %s760 = sshll.u32 %s756, 4
          %s761 = int_to_ptr.hbm [resolvable:$true] %s760
          %763 = dma.vmem_to_hbm [thread:$0]  %s759, 128, %s761, %s732
        $region72: #{tpu_custom_call.1} parent=43 // pred_fallthru
          _
      $region44: #{tpu_custom_call.1} parent=5 // pred_fallthru
        _
      %p764 = scmp.le.s32.totalorder 2, %s24
      // Predicated region
      $region73: #{tpu_custom_call.1} parent=5 // pred_check
        %p765 = pneg %p764
      $region74: #{tpu_custom_call.1} parent=5 // pred_check_branch
        %767 = sbr.rel (%p765) target = $region76
      $region75: #{tpu_custom_call.1} parent=5 // pred_region
        %s768 = ssub.s32 %s24, 2
        // Predicated region
        $region77: #{tpu_custom_call.1} parent=75 // pred_check
          %p769 = pneg %p199
        $region78: #{tpu_custom_call.1} parent=75 // pred_check_branch
          %771 = sbr.rel (%p769) target = $region80
        $region79: #{tpu_custom_call.1} parent=75 // pred_region
          %s772 = sand.u32 %s184, 1
          %s773 = scalar_lea.sflag [#allocation4], %s772
          %s774 = sand.u32 %s184, 1
          %s775 = smul.addr %s774, 8
          %s776 = scalar_lea.vmem [#allocation10], %s775
          %778 = dma.done %s773, 128
        $region80: #{tpu_custom_call.1} parent=75 // pred_fallthru
          _
        // Predicated region
        $region81: #{tpu_custom_call.1} parent=75 // pred_check
          %p779 = pneg %p225
        $region82: #{tpu_custom_call.1} parent=75 // pred_check_branch
          %781 = sbr.rel (%p779) target = $region84
        $region83: #{tpu_custom_call.1} parent=75 // pred_region
          %s782 = sand.u32 %s210, 1
          %s783 = scalar_lea.sflag [#allocation12], %s782
          %s784 = sand.u32 %s210, 1
          %s785 = smul.addr %s784, 8
          %s786 = scalar_lea.vmem [#allocation11], %s785
          %788 = dma.done %s783, 128
        $region84: #{tpu_custom_call.1} parent=75 // pred_fallthru
          _
      $region76: #{tpu_custom_call.1} parent=5 // pred_fallthru
        _
    $region6: #{tpu_custom_call.1} parent=1 // loop_footer
      %s28 = sadd.s32 1, %s24
    $region7: #{tpu_custom_call.1} parent=1 // loop_footer_branch
      %23 = sbr.rel target = $region3
    $region8: #{tpu_custom_call.1} parent=1 // loop_exit
      _
    %789 = vsyncpa [#allocation3], 1
    %s790 = scalar_lea.sflag [#allocation3], 1
    %791 = vsyncpa %s790, 1
    %792 = vsyncpa [#allocation6], 1
    %793 = vsyncpa [#allocation4], 1
    %s794 = scalar_lea.sflag [#allocation4], 1
    %795 = vsyncpa %s794, 1
    %796 = vsyncpa [#allocation12], 1
    %s797 = scalar_lea.sflag [#allocation12], 1
    %798 = vsyncpa %s797, 1

</llo_original>
